<compile_context>
chip_gen: v6e
topology: v6e:2x2x1
jax: 0.10.0
libtpu: 0.0.40
codegen_flags: <defaults>
</compile_context>

<pallas_src>
import math

import jax
import jax.numpy as jnp
from jax.experimental import pallas as pl
from jax.experimental.pallas import tpu as pltpu


KEY_ORDER = ("tempo_key", "chord_key", "barbeat_key", "type_key",
             "pitch_key", "duration_key", "velocity_key")


def _fused_emb_kernel(x_ref, w_ref, b_ref, o_ref):
    # One lane-dense MXU matmul: (TM, K_total) @ (K_total, D_total) -> (TM, D_total).
    # sqrt(d_emb_k) and the per-segment biases are already folded into w_ref / b_ref
    # at trace time, so the epilogue is a single broadcast-add + store.
    acc = jnp.dot(x_ref[...], w_ref[...], preferred_element_type=jnp.float32)
    o_ref[...] = (acc + b_ref[...]).astype(o_ref.dtype)


def _ceil_to(v, mult):
    return -(-v // mult) * mult


def multi_embedding_linear(xs, weights, biases, *, tile_m=2048):
    """Fused MultiEmbeddingLinear forward.

    xs:      list of 7 arrays, xs[k] has shape (..., n_token_k)   (same leading dims)
    weights: list of 7 arrays, weights[k] has shape (d_emb_k, n_token_k)
    biases:  list of 7 arrays, biases[k] has shape (d_emb_k,)
    Returns: (..., sum_k d_emb_k) == concat_k (x_k @ W_k^T + b_k) * sqrt(d_emb_k)
    """
    lead = xs[0].shape[:-1]
    m = math.prod(lead) if lead else 1
    n_toks = [x.shape[-1] for x in xs]
    d_embs = [w.shape[0] for w in weights]
    k_total = sum(n_toks)
    d_total = sum(d_embs)

    # Pack the 7 token streams into one (M, K_total) slab: one streamed DMA per grid
    # step instead of 7 lane-padded tiles.
    x_packed = jnp.concatenate([x.reshape(m, k) for x, k in zip(xs, n_toks)], axis=-1)

    # Block-diagonal fused weight (K_total, D_total) with sqrt(d_emb_k) folded in,
    # plus the concatenated pre-scaled bias. Built once at f32 trace time (tiny).
    w_big = jnp.zeros((k_total, d_total), dtype=jnp.float32)
    k_off = 0
    d_off = 0
    for w, k, d in zip(weights, n_toks, d_embs):
        w_big = w_big.at[k_off:k_off + k, d_off:d_off + d].set(
            w.T.astype(jnp.float32) * math.sqrt(d))
        k_off += k
        d_off += d
    b_big = jnp.concatenate(
        [b.astype(jnp.float32) * math.sqrt(d) for b, d in zip(biases, d_embs)]
    ).reshape(1, d_total)

    # Row tile: multiple of 8, capped by tile_m and by the (8-padded) M so tiny
    # inputs still compile; for realistic M this yields multiple grid steps that
    # shard across TensorCores on v7x.
    m_pad8 = max(8, _ceil_to(m, 8))
    tm = min(tile_m, m_pad8)
    grid = (pl.cdiv(m, tm),)

    # Explicit VMEM budget: double-buffered x/out tiles + resident weight/bias.
    lane_k = _ceil_to(k_total, 128)
    lane_d = _ceil_to(d_total, 128)
    vmem_bytes = 4 * (2 * tm * lane_k               # streamed x tiles (2 buffers)
                      + 2 * tm * lane_d             # streamed out tiles (2 buffers)
                      + 2 * _ceil_to(k_total, 8) * lane_d   # resident fused weight
                      + 2 * 8 * lane_d)             # resident fused bias
    vmem_limit = min(max(vmem_bytes + (4 << 20), 32 << 20), 64 << 20)

    flops = 2 * m * k_total * d_total
    bytes_accessed = 4 * (m * k_total + k_total * d_total + d_total + m * d_total)
    cost = pl.CostEstimate(flops=flops, transcendentals=0,
                           bytes_accessed=bytes_accessed)

    out = pl.pallas_call(
        _fused_emb_kernel,
        out_shape=jax.ShapeDtypeStruct((m, d_total), xs[0].dtype),
        grid_spec=pltpu.PrefetchScalarGridSpec(
            num_scalar_prefetch=0,
            grid=grid,
            in_specs=[
                # streamed packed-x row tiles
                pl.BlockSpec((tm, k_total), lambda i: (i, 0)),
                # VMEM-resident fused block-diagonal weight (same block every step)
                pl.BlockSpec((k_total, d_total), lambda i: (0, 0)),
                # VMEM-resident fused bias
                pl.BlockSpec((1, d_total), lambda i: (0, 0)),
            ],
            out_specs=pl.BlockSpec((tm, d_total), lambda i: (i, 0)),
        ),
        compiler_params=pltpu.CompilerParams(
            dimension_semantics=("parallel",),
            vmem_limit_bytes=vmem_limit),
        cost_estimate=cost,
    )(x_packed, w_big, b_big)

    return out.reshape(*lead, d_total)


if __name__ == "__main__":
    # Small shapes consistent with the module: 7 vocab streams, each (batch, seq, n_token_k).
    batch, seq = 2, 8
    n_tokens_dict = dict(zip(KEY_ORDER, (24, 48, 16, 8, 40, 24, 16)))   # sum = 176
    d_emb_dict = dict(zip(KEY_ORDER, (32, 64, 32, 16, 64, 32, 16)))     # sum = 256 (lane-dense)

    key = jax.random.PRNGKey(0)
    xs, weights, biases = [], [], []
    for name in KEY_ORDER:
        n_tok = n_tokens_dict[name]
        d_emb = d_emb_dict[name]
        key, kx, kw, kb = jax.random.split(key, 4)
        xs.append(jax.random.normal(kx, (batch, seq, n_tok), dtype=jnp.float32))
        # nn.Linear default init: U(-1/sqrt(fan_in), 1/sqrt(fan_in))
        bound = 1.0 / math.sqrt(n_tok)
        weights.append(jax.random.uniform(kw, (d_emb, n_tok), dtype=jnp.float32,
                                          minval=-bound, maxval=bound))
        biases.append(jax.random.uniform(kb, (d_emb,), dtype=jnp.float32,
                                         minval=-bound, maxval=bound))

    out = multi_embedding_linear(xs, weights, biases)
    jax.block_until_ready(out)

    # Pure-JAX reference with the same semantics as the PyTorch module.
    ref = jnp.concatenate(
        [(x @ w.T + b) * math.sqrt(w.shape[0])
         for x, w, b in zip(xs, weights, biases)], axis=-1)

    d_total = sum(d_emb_dict.values())
    assert out.shape == (batch, seq, d_total)
    assert jnp.allclose(out, ref, atol=1e-4, rtol=1e-4)

    print("KERNEL_OK")
</pallas_src>

<mosaic_0001>
module attributes {stable_mosaic.version = 11 : i64} {
  func.func @_fused_emb_kernel(%arg0: i32, %arg1: memref<16x176xf32, #tpu.memory_space<vmem>>, %arg2: memref<176x256xf32, #tpu.memory_space<vmem>>, %arg3: memref<1x256xf32, #tpu.memory_space<vmem>>, %arg4: memref<16x256xf32, #tpu.memory_space<vmem>>) attributes {dimension_semantics = [#tpu.dimension_semantics<parallel>], iteration_bounds = array<i64: 1>, scalar_prefetch = 0 : i64, scratch_operands = 0 : i64, tpu.core_type = #tpu.core_type<tc>, window_params = [{transform_indices = @transform_0, window_bounds = array<i64: 16, 176>}, {pipeline_mode = #tpu.pipeline_mode<synchronous>, transform_indices = @transform_1, window_bounds = array<i64: 176, 256>}, {pipeline_mode = #tpu.pipeline_mode<synchronous>, transform_indices = @transform_2, window_bounds = array<i64: 1, 256>}, {transform_indices = @transform_3, window_bounds = array<i64: 16, 256>}]} {
    %c0 = arith.constant 0 : index
    %c0_0 = arith.constant 0 : index
    %0 = vector.load %arg1[%c0, %c0_0] : memref<16x176xf32, #tpu.memory_space<vmem>>, vector<16x176xf32>
    %c0_1 = arith.constant 0 : index
    %c0_2 = arith.constant 0 : index
    %1 = vector.load %arg2[%c0_1, %c0_2] : memref<176x256xf32, #tpu.memory_space<vmem>>, vector<176x256xf32>
    %cst = arith.constant dense<0.000000e+00> : vector<16x256xf32>
    %2 = tpu.matmul %0, %1, %cst {dimension_numbers = #tpu.dot_dimension_numbers<[1], [0], [0], [1], [0, 0, 1, 1], [], []>} : vector<16x176xf32>, vector<176x256xf32>, vector<16x256xf32> -> vector<16x256xf32>
    %c0_3 = arith.constant 0 : index
    %c0_4 = arith.constant 0 : index
    %3 = vector.load %arg3[%c0_3, %c0_4] : memref<1x256xf32, #tpu.memory_space<vmem>>, vector<1x256xf32>
    %4 = vector.broadcast %3 : vector<1x256xf32> to vector<16x256xf32>
    %5 = arith.addf %2, %4 : vector<16x256xf32>
    %c0_5 = arith.constant 0 : index
    %c0_6 = arith.constant 0 : index
    %6 = vector.load %arg4[%c0_5, %c0_6] : memref<16x256xf32, #tpu.memory_space<vmem>>, vector<16x256xf32>
    tpu.vector_store %arg4[%c0_5, %c0_6], %5 {strides = array<i32>} : memref<16x256xf32, #tpu.memory_space<vmem>>, vector<16x256xf32>,
    return
  }
  func.func @transform_0(%arg0: i32) -> (i32, i32) {
    %c0_i32 = arith.constant 0 : i32
    %c0_i32_0 = arith.constant 0 : i32
    return %arg0, %c0_i32 : i32, i32
  }
  func.func @transform_1(%arg0: i32) -> (i32, i32) {
    %c0_i32 = arith.constant 0 : i32
    %c0_i32_0 = arith.constant 0 : i32
    %c0_i32_1 = arith.constant 0 : i32
    return %c0_i32, %c0_i32_0 : i32, i32
  }
  func.func @transform_2(%arg0: i32) -> (i32, i32) {
    %c0_i32 = arith.constant 0 : i32
    %c0_i32_0 = arith.constant 0 : i32
    %c0_i32_1 = arith.constant 0 : i32
    return %c0_i32, %c0_i32_0 : i32, i32
  }
  func.func @transform_3(%arg0: i32) -> (i32, i32) {
    %c0_i32 = arith.constant 0 : i32
    %c0_i32_0 = arith.constant 0 : i32
    return %arg0, %c0_i32 : i32, i32
  }
}

</mosaic_0001>

<llo_original>
// kernel: tpu_custom_call.1
$region0: #{tpu_custom_call.1}
  #allocation0 [shape = 'u32[]', space=smem, size = 0x4, offset = 0x4, fixed_abs, tag = 'smem constant byte address 0x4 - core index']
  #allocation1 [shape = 'u32[144,128]{1,0:T(1,128)}', space=vmem, size = 0x12000, scoped, tag = 'internal scratch']
  %s0 = inlined_call_operand.hbm [shape: f32[16,176], index: 0, kind: input, shape index: {}]
  %s1 = inlined_call_operand.hbm [shape: f32[176,256], index: 1, kind: input, shape index: {}]
  %s2 = inlined_call_operand.vmem [shape: f32[1,256], index: 2, kind: input, shape index: {}]
  %s3 = inlined_call_operand.hbm [shape: f32[16,256], index: 3, kind: output, shape index: {}]
  %s4 = sld [smem:[#allocation0]]
  $region30: #{tpu_custom_call.1} parent=0
    _
  %s6 = ssub.s32 1, %s4
  %s7 = scalar_select 0, %s6, %s4
  $region1: #{tpu_custom_call.1} parent=0
    #allocation2 [shape = 'u8[16384]{0}', space=vmem, size = 0x4000, scoped, tag = 'input window, operand 0, single buffered']
    #allocation3 [shape = 's32[1]{0}', space=sflag, size = 0x4, scoped, tag = 'scoped memory for tpu_custom_call.1']
    #allocation4 [shape = 's32[1]{0}', space=sflag, size = 0x4, scoped, tag = 'scoped memory for tpu_custom_call.1']
    #allocation5 [shape = 'u8[180224]{0}', space=vmem, size = 0x2c000, scoped, tag = 'input window, operand 1, single buffered']
    #allocation6 [shape = 's32[1]{0}', space=sflag, size = 0x4, scoped, tag = 'scoped memory for tpu_custom_call.1']
    #allocation7 [shape = 'u8[16384]{0}', space=vmem, size = 0x4000, scoped, tag = 'output window, operand 0, single buffered']
    %8 = vsyncpa [#allocation3], 0
    %9 = vsyncpa [#allocation6], 0
    %10 = vsyncpa [#allocation4], 0
    // Predicated region
    $region2: #{tpu_custom_call.1} parent=1 // pred_check
      _
    $region3: #{tpu_custom_call.1} parent=1 // pred_check_branch
      %12 = sbr.rel (0) target = $region5
    $region4: #{tpu_custom_call.1} parent=1 // pred_region
      %s14 = ssub.s32 512, 512
      %15 = vsyncadd [#allocation3], %s14
      %s16 = sshll.u32 [#allocation2], 4
      %s17 = int_to_ptr.vmem [resolvable:$true] %s16
      %22 = dma.hbm_to_vmem [thread:$0]  %s0, 512, %s17, [#allocation3], 256, 256, 16
    $region5: #{tpu_custom_call.1} parent=1 // pred_fallthru
      _
    // Predicated region
    $region6: #{tpu_custom_call.1} parent=1 // pred_check
      _
    $region7: #{tpu_custom_call.1} parent=1 // pred_check_branch
      %24 = sbr.rel (0) target = $region9
    $region8: #{tpu_custom_call.1} parent=1 // pred_region
      %s26 = ssub.s32 5632, 5632
      %27 = vsyncadd [#allocation6], %s26
      %s28 = sshll.u32 [#allocation5], 4
      %s29 = int_to_ptr.vmem [resolvable:$true] %s28
      %34 = dma.hbm_to_vmem [thread:$0]  %s1, 5632, %s29, [#allocation6], 256, 256, 16
    $region9: #{tpu_custom_call.1} parent=1 // pred_fallthru
      _
    // Predicated region
    $region10: #{tpu_custom_call.1} parent=1 // pred_check
      _
    $region11: #{tpu_custom_call.1} parent=1 // pred_check_branch
      %36 = sbr.rel (0) target = $region13
    $region12: #{tpu_custom_call.1} parent=1 // pred_region
      _
    $region13: #{tpu_custom_call.1} parent=1 // pred_fallthru
      _
    // Predicated region
    $region14: #{tpu_custom_call.1} parent=1 // pred_check
      _
    $region15: #{tpu_custom_call.1} parent=1 // pred_check_branch
      %38 = sbr.rel (0) target = $region17
    $region16: #{tpu_custom_call.1} parent=1 // pred_region
      %39 = dma.done [#allocation3], 512
    $region17: #{tpu_custom_call.1} parent=1 // pred_fallthru
      _
    // Predicated region
    $region18: #{tpu_custom_call.1} parent=1 // pred_check
      _
    $region19: #{tpu_custom_call.1} parent=1 // pred_check_branch
      %41 = sbr.rel (0) target = $region21
    $region20: #{tpu_custom_call.1} parent=1 // pred_region
      %42 = dma.done [#allocation6], 5632
    $region21: #{tpu_custom_call.1} parent=1 // pred_fallthru
      _
    %v43 = vld [vmem:[#allocation2] sm:$0xff]
    %v44 = vld [vmem:[#allocation2 + $0x8] sm:$0xff]
    %v45 = vld [vmem:[#allocation2 + $0x10] sm:$0xff]
    %v46 = vld [vmem:[#allocation2 + $0x18] sm:$0xff]
    %v47 = vld [vmem:[#allocation5] sm:$0xff]
    %v48 = vld [vmem:[#allocation5 + $0x8] sm:$0xff]
    %v49 = vld [vmem:[#allocation5 + $0x10] sm:$0xff]
    %v50 = vld [vmem:[#allocation5 + $0x18] sm:$0xff]
    %v51 = vld [vmem:[#allocation5 + $0x20] sm:$0xff]
    %v52 = vld [vmem:[#allocation5 + $0x28] sm:$0xff]
    %v53 = vld [vmem:[#allocation5 + $0x30] sm:$0xff]
    %v54 = vld [vmem:[#allocation5 + $0x38] sm:$0xff]
    %v55 = vld [vmem:[#allocation5 + $0x40] sm:$0xff]
    %v56 = vld [vmem:[#allocation5 + $0x48] sm:$0xff]
    %v57 = vld [vmem:[#allocation5 + $0x50] sm:$0xff]
    %v58 = vld [vmem:[#allocation5 + $0x58] sm:$0xff]
    %v59 = vld [vmem:[#allocation5 + $0x60] sm:$0xff]
    %v60 = vld [vmem:[#allocation5 + $0x68] sm:$0xff]
    %v61 = vld [vmem:[#allocation5 + $0x70] sm:$0xff]
    %v62 = vld [vmem:[#allocation5 + $0x78] sm:$0xff]
    %v63 = vld [vmem:[#allocation5 + $0x80] sm:$0xff]
    %v64 = vld [vmem:[#allocation5 + $0x88] sm:$0xff]
    %v65 = vld [vmem:[#allocation5 + $0x90] sm:$0xff]
    %v66 = vld [vmem:[#allocation5 + $0x98] sm:$0xff]
    %v67 = vld [vmem:[#allocation5 + $0xa0] sm:$0xff]
    %v68 = vld [vmem:[#allocation5 + $0xa8] sm:$0xff]
    %v69 = vld [vmem:[#allocation5 + $0xb0] sm:$0xff]
    %v70 = vld [vmem:[#allocation5 + $0xb8] sm:$0xff]
    %v71 = vld [vmem:[#allocation5 + $0xc0] sm:$0xff]
    %v72 = vld [vmem:[#allocation5 + $0xc8] sm:$0xff]
    %v73 = vld [vmem:[#allocation5 + $0xd0] sm:$0xff]
    %v74 = vld [vmem:[#allocation5 + $0xd8] sm:$0xff]
    %v75 = vld [vmem:[#allocation5 + $0xe0] sm:$0xff]
    %v76 = vld [vmem:[#allocation5 + $0xe8] sm:$0xff]
    %v77 = vld [vmem:[#allocation5 + $0xf0] sm:$0xff]
    %v78 = vld [vmem:[#allocation5 + $0xf8] sm:$0xff]
    %v79 = vld [vmem:[#allocation5 + $0x100] sm:$0xff]
    %v80 = vld [vmem:[#allocation5 + $0x108] sm:$0xff]
    %v81 = vld [vmem:[#allocation5 + $0x110] sm:$0xff]
    %v82 = vld [vmem:[#allocation5 + $0x118] sm:$0xff]
    %v83 = vld [vmem:[#allocation5 + $0x120] sm:$0xff]
    %v84 = vld [vmem:[#allocation5 + $0x128] sm:$0xff]
    %v85 = vld [vmem:[#allocation5 + $0x130] sm:$0xff]
    %v86 = vld [vmem:[#allocation5 + $0x138] sm:$0xff]
    %v87 = vld [vmem:[#allocation5 + $0x140] sm:$0xff]
    %v88 = vld [vmem:[#allocation5 + $0x148] sm:$0xff]
    %v89 = vld [vmem:[#allocation5 + $0x150] sm:$0xff]
    %v90 = vld [vmem:[#allocation5 + $0x158] sm:$0xff]
    %v91 = vld [vmem:[%s2] sm:$0x3]
    %v93 = vlaneseq
    %v94 = vshrl.u32 %v93, 7
    %v95 = vsub.s32 0, %v94
    %v96 = vrot.slane %v91, %v95
    %v97 = vlaneseq
    %v98 = vshrl.u32 %v97, 7
    %v99 = vsub.s32 1, %v98
    %v100 = vrot.slane %v91, %v99
    %vm103 = vcmask 392192
    %v105 = vsel %vm103, %v44, 0
    %v108 = vsel %vm103, %v46, 0
    %110 = vmatprep.subr.mxu0 %v78
    %111 = vmatpush1.msra.mxu0 %v77
    %112 = vmatprep.subr.mxu0 %v76
    %113 = vmatpush1.msra.mxu0 %v75
    %114 = vmatprep.subr.mxu0 %v74
    %115 = vmatpush1.msra.mxu0 %v73
    %116 = vmatprep.subr.mxu0 %v72
    %117 = vmatpush1.msra.mxu0 %v71
    %118 = vmatprep.subr.mxu0 %v70
    %119 = vmatpush1.msra.mxu0 %v69
    %120 = vmatprep.subr.mxu0 %v68
    %121 = vmatpush1.msra.mxu0 %v67
    %122 = vmatprep.subr.mxu0 %v66
    %123 = vmatpush1.msra.mxu0 %v65
    %124 = vmatprep.subr.mxu0 %v64
    %125 = vmatpush1.msra.mxu0 %v63
    %126 = vmatprep.subr.mxu0 %v62
    %127 = vmatpush1.msra.mxu0 %v61
    %128 = vmatprep.subr.mxu0 %v60
    %129 = vmatpush1.msra.mxu0 %v59
    %130 = vmatprep.subr.mxu0 %v58
    %131 = vmatpush1.msra.mxu0 %v57
    %132 = vmatprep.subr.mxu0 %v56
    %133 = vmatpush1.msra.mxu0 %v55
    %134 = vmatprep.subr.mxu0 %v54
    %135 = vmatpush1.msra.mxu0 %v53
    %136 = vmatprep.subr.mxu0 %v52
    %137 = vmatpush1.msra.mxu0 %v51
    %138 = vmatprep.subr.mxu0 %v50
    %139 = vmatpush1.msra.mxu0 %v49
    %140 = vmatprep.subr.mxu0 %v48
    %141 = vmatpush1.msra.mxu0 %v47
    %142 = vmatprep.subr.mxu0 0.0
    %143 = vmatpush2.msra.mxu0 0.0
    %144 = vmatprep.subr.mxu0 0.0
    %145 = vmatpush2.msra.mxu0 0.0
    %146 = vmatprep.subr.mxu0 0.0
    %147 = vmatpush2.msra.mxu0 0.0
    %148 = vmatprep.subr.mxu0 0.0
    %149 = vmatpush2.msra.mxu0 0.0
    %150 = vmatprep.subr.mxu0 0.0
    %151 = vmatpush2.msra.mxu0 0.0
    %152 = vmatprep.subr.mxu0 0.0
    %153 = vmatpush2.msra.mxu0 0.0
    %154 = vmatprep.subr.mxu0 0.0
    %155 = vmatpush2.msra.mxu0 0.0
    %156 = vmatprep.subr.mxu0 0.0
    %157 = vmatpush2.msra.mxu0 0.0
    %158 = vmatprep.subr.mxu0 0.0
    %159 = vmatpush2.msra.mxu0 0.0
    %160 = vmatprep.subr.mxu0 0.0
    %161 = vmatpush2.msra.mxu0 0.0
    %162 = vmatprep.subr.mxu0 %v90
    %163 = vmatpush2.msra.mxu0 %v89
    %164 = vmatprep.subr.mxu0 %v88
    %165 = vmatpush2.msra.mxu0 %v87
    %166 = vmatprep.subr.mxu0 %v86
    %167 = vmatpush2.msra.mxu0 %v85
    %168 = vmatprep.subr.mxu0 %v84
    %169 = vmatpush2.msra.mxu0 %v83
    %170 = vmatprep.subr.mxu0 %v82
    %171 = vmatpush2.msra.mxu0 %v81
    %172 = vmatprep.subr.mxu0 %v80
    %173 = vmatpush2.msra.mxu0 %v79
    %174 = vmatprep.mubr.f32.mxu0 %v105
    %175 = vmatmul.mubr.f32.gmra.mxu0 %v43
    %v176 = vpop.f32.mrf.mxu0
    %v177 = vadd.f32 %v96, %v176
    %v178 = vpop.f32.mrf.mxu0
    %v179 = vadd.f32 %v100, %v178
    %180 = vmatprep.mubr.f32.mxu0 %v108
    %181 = vmatmul.mubr.f32.gmra.mxu0 %v45
    %v182 = vpop.f32.mrf.mxu0
    %v183 = vadd.f32 %v96, %v182
    %v184 = vpop.f32.mrf.mxu0
    %v185 = vadd.f32 %v100, %v184
    %186 = vdwg.mxu0
    %187 = vst [vmem:[#allocation7] sm:$0xff] %v177
    %188 = vst [vmem:[#allocation7 + $0x8] sm:$0xff] %v179
    %189 = vst [vmem:[#allocation7 + $0x10] sm:$0xff] %v183
    %190 = vst [vmem:[#allocation7 + $0x18] sm:$0xff] %v185
    // Predicated region
    $region22: #{tpu_custom_call.1} parent=1 // pred_check
      _
    $region23: #{tpu_custom_call.1} parent=1 // pred_check_branch
      %192 = sbr.rel (0) target = $region25
    $region24: #{tpu_custom_call.1} parent=1 // pred_region
      %s194 = ssub.s32 512, 512
      %195 = vsyncadd [#allocation4], %s194
      %s196 = sshll.u32 [#allocation7], 4
      %s197 = int_to_ptr.vmem [resolvable:$true] %s196
      %202 = dma.vmem_to_hbm [thread:$0]  %s197, 512, %s3, [#allocation4], 256, 256, 16
    $region25: #{tpu_custom_call.1} parent=1 // pred_fallthru
      _
    // Predicated region
    $region26: #{tpu_custom_call.1} parent=1 // pred_check
      _
    $region27: #{tpu_custom_call.1} parent=1 // pred_check_branch
      %204 = sbr.rel (0) target = $region29
    $region28: #{tpu_custom_call.1} parent=1 // pred_region
      %205 = dma.done [#allocation4], 512
    $region29: #{tpu_custom_call.1} parent=1 // pred_fallthru
      _
    %206 = vsyncpa [#allocation3], 1
    %207 = vsyncpa [#allocation6], 1
    %208 = vsyncpa [#allocation4], 1

</llo_original>
